<compile_context>
chip_gen: v7x
topology: tpu7x:2x2x1
jax: 0.10.0
libtpu: 0.0.40
codegen_flags: <defaults>
</compile_context>

<pallas_src>
import functools

import jax
import jax.numpy as jnp
from jax.experimental import pallas as pl
from jax.experimental.pallas import tpu as pltpu


def _choose_tiles(B, D, tile_b, tile_d, itemsize):
    """Pick (TILE_B, TILE_D) honoring the (8,128) block constraint with a
    ~2 MiB per-input-tile budget (x2 inputs x2 pipeline buffers)."""
    if tile_d is None:
        tile_d = D if D <= 2048 else 1024          # multiple of 128 when < D
    if tile_b is None:
        target_bytes = 2 * 1024 * 1024             # per input tile
        tb = target_bytes // (max(tile_d, 1) * itemsize)
        tb = max(8, min(1024, (tb // 8) * 8))
        tile_b = B if tb >= B else tb
    assert tile_d == D or tile_d % 128 == 0, "TILE_D must be D or a multiple of 128"
    assert tile_b == B or tile_b % 8 == 0, "TILE_B must be B or a multiple of 8"
    return tile_b, tile_d


def _make_rsquare_kernel(B, D, TILE_B, TILE_D, n_b_tiles):
    need_row_mask = (B % TILE_B) != 0
    need_col_mask = (D % TILE_D) != 0
    inv_b = 1.0 / float(B)

    def kernel(yp_ref, yt_ref, ratio_ref, s_t_ref, s_t2_ref, s_res_ref):
        j = pl.program_id(1)                       # batch (reduction) axis

        @pl.when(j == 0)
        def _():
            s_t_ref[...] = jnp.zeros_like(s_t_ref)
            s_t2_ref[...] = jnp.zeros_like(s_t2_ref)
            s_res_ref[...] = jnp.zeros_like(s_res_ref)

        # In-kernel cast: inputs stay in their native (possibly bf16) dtype
        # through HBM/DMA; the VPU widens on load.
        yt = yt_ref[...].astype(jnp.float32)
        yp = yp_ref[...].astype(jnp.float32)

        if need_row_mask:                          # last batch tile is partial
            rows = jax.lax.broadcasted_iota(jnp.int32, (TILE_B, 1), 0) + j * TILE_B
            rmask = rows < B
            yt = jnp.where(rmask, yt, 0.0)
            yp = jnp.where(rmask, yp, 0.0)
        if need_col_mask:                          # last feature tile is partial
            i = pl.program_id(0)
            cols = jax.lax.broadcasted_iota(jnp.int32, (1, TILE_D), 1) + i * TILE_D
            cmask = cols < D
            yt = jnp.where(cmask, yt, 0.0)
            yp = jnp.where(cmask, yp, 0.0)

        diff = yt - yp
        s_t_ref[...] += jnp.sum(yt, axis=0, keepdims=True)             # sum t
        s_t2_ref[...] += jnp.sum(yt * yt, axis=0, keepdims=True)       # sum t^2
        s_res_ref[...] += jnp.sum(diff * diff, axis=0, keepdims=True)  # sum (t-p)^2

        @pl.when(j == n_b_tiles - 1)
        def _():
            s_t = s_t_ref[...]
            s_t2 = s_t2_ref[...]
            s_res = s_res_ref[...]
            # sum((t - mean)^2) = sum(t^2) - (sum t)^2 / B
            ss_total = s_t2 - (s_t * s_t) * inv_b
            ss_total = jnp.maximum(ss_total, 1e-8)   # torch.clamp(min=1e-8)
            ratio_ref[...] = (s_res / ss_total).astype(ratio_ref.dtype)

    return kernel


@functools.partial(jax.jit, static_argnames=("tile_b", "tile_d"))
def r_square(y_pred, y_true, *, tile_b=None, tile_d=None):
    """1 - mean_j( sum_i (t_ij - p_ij)^2 / clamp(sum_i (t_ij - mean_i t_ij)^2, 1e-8) )."""
    assert y_pred.shape == y_true.shape and y_pred.ndim == 2
    B, D = y_true.shape
    itemsize = jnp.dtype(y_true.dtype).itemsize
    TILE_B, TILE_D = _choose_tiles(B, D, tile_b, tile_d, itemsize)
    n_b = pl.cdiv(B, TILE_B)
    n_d = pl.cdiv(D, TILE_D)

    kernel = _make_rsquare_kernel(B, D, TILE_B, TILE_D, n_b)

    ratios = pl.pallas_call(
        kernel,
        out_shape=jax.ShapeDtypeStruct((1, D), jnp.float32),
        grid_spec=pltpu.PrefetchScalarGridSpec(
            num_scalar_prefetch=0,
            grid=(n_d, n_b),                       # reduction axis last
            in_specs=[
                pl.BlockSpec((TILE_B, TILE_D), lambda i, j: (j, i)),
                pl.BlockSpec((TILE_B, TILE_D), lambda i, j: (j, i)),
            ],
            out_specs=pl.BlockSpec((1, TILE_D), lambda i, j: (0, i)),
            scratch_shapes=[pltpu.VMEM((1, TILE_D), jnp.float32)] * 3,
        ),
        compiler_params=pltpu.CompilerParams(
            dimension_semantics=("parallel", "arbitrary"),
            vmem_limit_bytes=48 * 1024 * 1024,
        ),
    )(y_pred, y_true)

    # Tiny D-length reduction; done in plain JAX so the feature grid axis
    # stays independent ("parallel") inside the kernel.
    return 1.0 - jnp.mean(ratios)


def _reference(y_pred, y_true):
    yt = y_true.astype(jnp.float32)
    yp = y_pred.astype(jnp.float32)
    y_mean = jnp.mean(yt, axis=0)
    ss_total = jnp.maximum(jnp.sum((yt - y_mean) ** 2, axis=0), 1e-8)
    ss_res = jnp.sum((yt - yp) ** 2, axis=0)
    return 1.0 - jnp.mean(ss_res / ss_total)


if __name__ == "__main__":
    key = jax.random.PRNGKey(0)
    k1, k2, k3, k4 = jax.random.split(key, 4)

    # Case 1: small, single-tile grid.
    B, D = 8, 32
    y_true = jax.random.normal(k1, (B, D), dtype=jnp.float32)
    y_pred = y_true + 0.1 * jax.random.normal(k2, (B, D), dtype=jnp.float32)
    out = r_square(y_pred, y_true)
    jax.block_until_ready(out)
    ref = _reference(y_pred, y_true)
    assert jnp.allclose(out, ref, rtol=1e-4, atol=1e-5), (out, ref)

    # Case 2: multi-tile grid with partial edge tiles on both axes.
    B, D = 50, 200
    yt = jax.random.normal(k3, (B, D), dtype=jnp.float32)
    yp = yt + 0.25 * jax.random.normal(k4, (B, D), dtype=jnp.float32)
    out2 = r_square(yp, yt, tile_b=16, tile_d=128)
    jax.block_until_ready(out2)
    ref2 = _reference(yp, yt)
    assert jnp.allclose(out2, ref2, rtol=1e-4, atol=1e-5), (out2, ref2)

    # Case 3: bf16 inputs -> cast to f32 inside the kernel (half the HBM bytes).
    out3 = r_square(yp.astype(jnp.bfloat16), yt.astype(jnp.bfloat16),
                    tile_b=16, tile_d=128)
    jax.block_until_ready(out3)
    ref3 = _reference(yp.astype(jnp.bfloat16), yt.astype(jnp.bfloat16))
    assert jnp.allclose(out3, ref3, rtol=5e-3, atol=5e-3), (out3, ref3)

    print("KERNEL_OK")
</pallas_src>

<mosaic_0001>
module attributes {stable_mosaic.version = 11 : i64} {
  func.func @kernel(%arg0: i32, %arg1: i32, %arg2: memref<8x32xf32, #tpu.memory_space<vmem>>, %arg3: memref<8x32xf32, #tpu.memory_space<vmem>>, %arg4: memref<1x32xf32, #tpu.memory_space<vmem>>, %arg5: memref<1x32xf32, #tpu.memory_space<vmem>>, %arg6: memref<1x32xf32, #tpu.memory_space<vmem>>, %arg7: memref<1x32xf32, #tpu.memory_space<vmem>>) attributes {dimension_semantics = [#tpu.dimension_semantics<parallel>, #tpu.dimension_semantics<arbitrary>], iteration_bounds = array<i64: 1, 1>, scalar_prefetch = 0 : i64, scratch_operands = 3 : i64, tpu.core_type = #tpu.core_type<tc>, window_params = [{transform_indices = @transform_0, window_bounds = array<i64: 8, 32>}, {transform_indices = @transform_1, window_bounds = array<i64: 8, 32>}, {transform_indices = @transform_2, window_bounds = array<i64: 1, 32>}]} {
    %c0_i32 = arith.constant 0 : i32
    %0 = arith.cmpi eq, %arg1, %c0_i32 : i32
    %1 = arith.extui %0 : i1 to i32
    %c0_i32_0 = arith.constant 0 : i32
    %2 = arith.cmpi ne, %1, %c0_i32_0 : i32
    scf.if %2 {
      %cst_20 = arith.constant 0.000000e+00 : f32
      %26 = vector.broadcast %cst_20 : f32 to vector<1x32xf32>
      %c0_21 = arith.constant 0 : index
      %c0_22 = arith.constant 0 : index
      %27 = vector.load %arg5[%c0_21, %c0_22] : memref<1x32xf32, #tpu.memory_space<vmem>>, vector<1x32xf32>
      tpu.vector_store %arg5[%c0_21, %c0_22], %26 {strides = array<i32>} : memref<1x32xf32, #tpu.memory_space<vmem>>, vector<1x32xf32>,
      %cst_23 = arith.constant 0.000000e+00 : f32
      %28 = vector.broadcast %cst_23 : f32 to vector<1x32xf32>
      %c0_24 = arith.constant 0 : index
      %c0_25 = arith.constant 0 : index
      %29 = vector.load %arg6[%c0_24, %c0_25] : memref<1x32xf32, #tpu.memory_space<vmem>>, vector<1x32xf32>
      tpu.vector_store %arg6[%c0_24, %c0_25], %28 {strides = array<i32>} : memref<1x32xf32, #tpu.memory_space<vmem>>, vector<1x32xf32>,
      %cst_26 = arith.constant 0.000000e+00 : f32
      %30 = vector.broadcast %cst_26 : f32 to vector<1x32xf32>
      %c0_27 = arith.constant 0 : index
      %c0_28 = arith.constant 0 : index
      %31 = vector.load %arg7[%c0_27, %c0_28] : memref<1x32xf32, #tpu.memory_space<vmem>>, vector<1x32xf32>
      tpu.vector_store %arg7[%c0_27, %c0_28], %30 {strides = array<i32>} : memref<1x32xf32, #tpu.memory_space<vmem>>, vector<1x32xf32>,
    } else {
    }
    %c0 = arith.constant 0 : index
    %c0_1 = arith.constant 0 : index
    %3 = vector.load %arg3[%c0, %c0_1] : memref<8x32xf32, #tpu.memory_space<vmem>>, vector<8x32xf32>
    %c0_2 = arith.constant 0 : index
    %c0_3 = arith.constant 0 : index
    %4 = vector.load %arg2[%c0_2, %c0_3] : memref<8x32xf32, #tpu.memory_space<vmem>>, vector<8x32xf32>
    %5 = arith.subf %3, %4 : vector<8x32xf32>
    %c0_4 = arith.constant 0 : index
    %c0_5 = arith.constant 0 : index
    %6 = vector.load %arg5[%c0_4, %c0_5] : memref<1x32xf32, #tpu.memory_space<vmem>>, vector<1x32xf32>
    %cst = arith.constant dense<0.000000e+00> : vector<32xf32>
    %7 = vector.multi_reduction <add>, %3, %cst [0] : vector<8x32xf32> to vector<32xf32>
    %8 = vector.shape_cast %7 : vector<32xf32> to vector<1x32xf32>
    %9 = arith.addf %6, %8 : vector<1x32xf32>
    %c0_6 = arith.constant 0 : index
    %c0_7 = arith.constant 0 : index
    %10 = vector.load %arg5[%c0_6, %c0_7] : memref<1x32xf32, #tpu.memory_space<vmem>>, vector<1x32xf32>
    tpu.vector_store %arg5[%c0_6, %c0_7], %9 {strides = array<i32>} : memref<1x32xf32, #tpu.memory_space<vmem>>, vector<1x32xf32>,
    %c0_8 = arith.constant 0 : index
    %c0_9 = arith.constant 0 : index
    %11 = vector.load %arg6[%c0_8, %c0_9] : memref<1x32xf32, #tpu.memory_space<vmem>>, vector<1x32xf32>
    %12 = arith.mulf %3, %3 : vector<8x32xf32>
    %cst_10 = arith.constant dense<0.000000e+00> : vector<32xf32>
    %13 = vector.multi_reduction <add>, %12, %cst_10 [0] : vector<8x32xf32> to vector<32xf32>
    %14 = vector.shape_cast %13 : vector<32xf32> to vector<1x32xf32>
    %15 = arith.addf %11, %14 : vector<1x32xf32>
    %c0_11 = arith.constant 0 : index
    %c0_12 = arith.constant 0 : index
    %16 = vector.load %arg6[%c0_11, %c0_12] : memref<1x32xf32, #tpu.memory_space<vmem>>, vector<1x32xf32>
    tpu.vector_store %arg6[%c0_11, %c0_12], %15 {strides = array<i32>} : memref<1x32xf32, #tpu.memory_space<vmem>>, vector<1x32xf32>,
    %c0_13 = arith.constant 0 : index
    %c0_14 = arith.constant 0 : index
    %17 = vector.load %arg7[%c0_13, %c0_14] : memref<1x32xf32, #tpu.memory_space<vmem>>, vector<1x32xf32>
    %18 = arith.mulf %5, %5 : vector<8x32xf32>
    %cst_15 = arith.constant dense<0.000000e+00> : vector<32xf32>
    %19 = vector.multi_reduction <add>, %18, %cst_15 [0] : vector<8x32xf32> to vector<32xf32>
    %20 = vector.shape_cast %19 : vector<32xf32> to vector<1x32xf32>
    %21 = arith.addf %17, %20 : vector<1x32xf32>
    %c0_16 = arith.constant 0 : index
    %c0_17 = arith.constant 0 : index
    %22 = vector.load %arg7[%c0_16, %c0_17] : memref<1x32xf32, #tpu.memory_space<vmem>>, vector<1x32xf32>
    tpu.vector_store %arg7[%c0_16, %c0_17], %21 {strides = array<i32>} : memref<1x32xf32, #tpu.memory_space<vmem>>, vector<1x32xf32>,
    %c0_i32_18 = arith.constant 0 : i32
    %23 = arith.cmpi eq, %arg1, %c0_i32_18 : i32
    %24 = arith.extui %23 : i1 to i32
    %c0_i32_19 = arith.constant 0 : i32
    %25 = arith.cmpi ne, %24, %c0_i32_19 : i32
    scf.if %25 {
      %c0_20 = arith.constant 0 : index
      %c0_21 = arith.constant 0 : index
      %26 = vector.load %arg5[%c0_20, %c0_21] : memref<1x32xf32, #tpu.memory_space<vmem>>, vector<1x32xf32>
      %c0_22 = arith.constant 0 : index
      %c0_23 = arith.constant 0 : index
      %27 = vector.load %arg6[%c0_22, %c0_23] : memref<1x32xf32, #tpu.memory_space<vmem>>, vector<1x32xf32>
      %c0_24 = arith.constant 0 : index
      %c0_25 = arith.constant 0 : index
      %28 = vector.load %arg7[%c0_24, %c0_25] : memref<1x32xf32, #tpu.memory_space<vmem>>, vector<1x32xf32>
      %29 = arith.mulf %26, %26 : vector<1x32xf32>
      %cst_26 = arith.constant 1.250000e-01 : f32
      %30 = vector.broadcast %cst_26 : f32 to vector<1x32xf32>
      %31 = arith.mulf %29, %30 : vector<1x32xf32>
      %32 = arith.subf %27, %31 : vector<1x32xf32>
      %cst_27 = arith.constant 9.99999993E-9 : f32
      %33 = vector.broadcast %cst_27 : f32 to vector<1x32xf32>
      %34 = arith.maximumf %32, %33 : vector<1x32xf32>
      %35 = arith.divf %28, %34 : vector<1x32xf32>
      %c0_28 = arith.constant 0 : index
      %c0_29 = arith.constant 0 : index
      %36 = vector.load %arg4[%c0_28, %c0_29] : memref<1x32xf32, #tpu.memory_space<vmem>>, vector<1x32xf32>
      tpu.vector_store %arg4[%c0_28, %c0_29], %35 {strides = array<i32>} : memref<1x32xf32, #tpu.memory_space<vmem>>, vector<1x32xf32>,
    } else {
    }
    return
  }
  func.func @transform_0(%arg0: i32, %arg1: i32) -> (i32, i32) {
    %c0_i32 = arith.constant 0 : i32
    return %arg1, %arg0 : i32, i32
  }
  func.func @transform_1(%arg0: i32, %arg1: i32) -> (i32, i32) {
    %c0_i32 = arith.constant 0 : i32
    return %arg1, %arg0 : i32, i32
  }
  func.func @transform_2(%arg0: i32, %arg1: i32) -> (i32, i32) {
    %c0_i32 = arith.constant 0 : i32
    %c0_i32_0 = arith.constant 0 : i32
    return %c0_i32, %arg0 : i32, i32
  }
}

</mosaic_0001>

<llo_original>
// kernel: r_square.1
$region0: #{r_square.1}
  #allocation0 [shape = 'u32[]', space=smem, size = 0x4, offset = 0x4, fixed_abs, tag = 'smem constant byte address 0x4 - core index']
  #allocation1 [shape = 'u32[144,128]{1,0:T(1,128)}', space=vmem, size = 0x12000, scoped, tag = 'internal scratch']
  #allocation2 [shape = 'f32[1,32]{1,0:T(1,128)}', space=vmem, size = 0x200, scoped, tag = 'scratch operand']
  #allocation3 [shape = 'f32[1,32]{1,0:T(1,128)}', space=vmem, size = 0x200, scoped, tag = 'scratch operand']
  #allocation4 [shape = 'f32[1,32]{1,0:T(1,128)}', space=vmem, size = 0x200, scoped, tag = 'scratch operand']
  %s0 = inlined_call_operand.hbm [shape: f32[8,32], index: 0, kind: input, shape index: {}]
  %s1 = inlined_call_operand.hbm [shape: f32[8,32], index: 1, kind: input, shape index: {}]
  %s2 = inlined_call_operand.vmem [shape: f32[1,32], index: 2, kind: output, shape index: {}]
  %s3 = sld [smem:[#allocation0]]
  $region34: #{r_square.1} parent=0
    _
  %s5 = ssub.s32 1, %s3
  %s6 = scalar_select 0, %s5, %s3
  $region1: #{r_square.1} parent=0
    #allocation5 [shape = 'u8[4096]{0}', space=vmem, size = 0x1000, scoped, tag = 'input window, operand 0, single buffered']
    #allocation6 [shape = 's32[1]{0}', space=sflag, size = 0x4, scoped, tag = 'scoped memory for r_square.1']
    #allocation7 [shape = 'u8[4096]{0}', space=vmem, size = 0x1000, scoped, tag = 'input window, operand 1, single buffered']
    #allocation8 [shape = 's32[1]{0}', space=sflag, size = 0x4, scoped, tag = 'scoped memory for r_square.1']
    %7 = vsyncpa [#allocation6], 0
    %8 = vsyncpa [#allocation8], 0
    // Predicated region
    $region2: #{r_square.1} parent=1 // pred_check
      _
    $region3: #{r_square.1} parent=1 // pred_check_branch
      %10 = sbr.rel (0) target = $region5
    $region4: #{r_square.1} parent=1 // pred_region
      %s12 = ssub.s32 128, 128
      %13 = vsyncadd [#allocation6], %s12
      %s15 = sshll.u32 [#allocation5], 4
      %s16 = int_to_ptr.vmem [resolvable:$true] %s15
      %18 = dma.hbm_to_vmem [thread:$0]  %s0, 128, %s16, [#allocation6]
    $region5: #{r_square.1} parent=1 // pred_fallthru
      _
    // Predicated region
    $region6: #{r_square.1} parent=1 // pred_check
      _
    $region7: #{r_square.1} parent=1 // pred_check_branch
      %20 = sbr.rel (0) target = $region9
    $region8: #{r_square.1} parent=1 // pred_region
      %s22 = ssub.s32 128, 128
      %23 = vsyncadd [#allocation8], %s22
      %s25 = sshll.u32 [#allocation7], 4
      %s26 = int_to_ptr.vmem [resolvable:$true] %s25
      %28 = dma.hbm_to_vmem [thread:$0]  %s1, 128, %s26, [#allocation8]
    $region9: #{r_square.1} parent=1 // pred_fallthru
      _
    // Predicated region
    $region10: #{r_square.1} parent=1 // pred_check
      _
    $region11: #{r_square.1} parent=1 // pred_check_branch
      %30 = sbr.rel (0) target = $region13
    $region12: #{r_square.1} parent=1 // pred_region
      %31 = dma.done [#allocation6], 128
    $region13: #{r_square.1} parent=1 // pred_fallthru
      _
    // Predicated region
    $region14: #{r_square.1} parent=1 // pred_check
      _
    $region15: #{r_square.1} parent=1 // pred_check_branch
      %33 = sbr.rel (0) target = $region17
    $region16: #{r_square.1} parent=1 // pred_region
      %34 = dma.done [#allocation8], 128
    $region17: #{r_square.1} parent=1 // pred_fallthru
      _
    %p35 = scmp.eq.s32.totalorder 0, 0
    // Predicated region
    $region18: #{r_square.1} parent=1 // pred_check
      %p36 = pneg %p35
    $region19: #{r_square.1} parent=1 // pred_check_branch
      %38 = sbr.rel (%p36) target = $region21
    $region20: #{r_square.1} parent=1 // pred_region
      %vm39 = vcmask 253952
      %40 = vst.msk [vmem:[#allocation2] sm:$0x1] %vm39, 0.0
      %41 = vst.msk [vmem:[#allocation3] sm:$0x1] %vm39, 0.0
      %42 = vst.msk [vmem:[#allocation4] sm:$0x1] %vm39, 0.0
    $region21: #{r_square.1} parent=1 // pred_fallthru
      _
    %v43 = vld [vmem:[#allocation7] sm:$0xff]
    %v44 = vld [vmem:[#allocation5] sm:$0xff]
    %v45 = vsub.f32 %v43, %v44
    %v46 = vld [vmem:[#allocation2] sm:$0x1]
    %vm47 = vcmask 261120
    %v48 = vsel %vm47, %v43, 0.0
    %v49 = vrot.slane %v48, 4
    %v50 = vadd.f32 %v48, %v49
    %v51 = vrot.slane %v50, 2
    %v52 = vadd.f32 %v50, %v51
    %v53 = vrot.slane %v52, 1
    %v54 = vadd.f32 %v52, %v53
    %v55 = vadd.f32 %v46, %v54
    %vm56 = vcmask 253952
    %57 = vst.msk [vmem:[#allocation2] sm:$0x1] %vm56, %v55
    %v58 = vld [vmem:[#allocation3] sm:$0x1]
    %v59 = vmul.f32 %v43, %v43
    %v60 = vsel %vm47, %v59, 0.0
    %v61 = vrot.slane %v60, 4
    %v62 = vadd.f32 %v60, %v61
    %v63 = vrot.slane %v62, 2
    %v64 = vadd.f32 %v62, %v63
    %v65 = vrot.slane %v64, 1
    %v66 = vadd.f32 %v64, %v65
    %v67 = vadd.f32 %v58, %v66
    %68 = vst.msk [vmem:[#allocation3] sm:$0x1] %vm56, %v67
    %v69 = vld [vmem:[#allocation4] sm:$0x1]
    %v70 = vmul.f32 %v45, %v45
    %v71 = vsel %vm47, %v70, 0.0
    %v72 = vrot.slane %v71, 4
    %v73 = vadd.f32 %v71, %v72
    %v74 = vrot.slane %v73, 2
    %v75 = vadd.f32 %v73, %v74
    %v76 = vrot.slane %v75, 1
    %v77 = vadd.f32 %v75, %v76
    %v78 = vadd.f32 %v69, %v77
    %79 = vst.msk [vmem:[#allocation4] sm:$0x1] %vm56, %v78
    // Predicated region
    $region22: #{r_square.1} parent=1 // pred_check
      %p80 = pneg %p35
    $region23: #{r_square.1} parent=1 // pred_check_branch
      %82 = sbr.rel (%p80) target = $region25
    $region24: #{r_square.1} parent=1 // pred_region
      %v83 = vld [vmem:[#allocation2] sm:$0x1]
      %v84 = vld [vmem:[#allocation3] sm:$0x1]
      %v85 = vld [vmem:[#allocation4] sm:$0x1]
      %v86 = vmul.f32 %v83, %v83
      %v87 = vmul.f32 %v86, 0.125
      %v88 = vsub.f32 %v84, %v87
      %v89 = vmax.f32 %v88, 1e-08
      %v90 = vrcp.pop %v89
      %v91 = vmul.f32 %v85, %v90
      %92 = vst.msk [vmem:[%s2] sm:$0x1] %vm56, %v91
    $region25: #{r_square.1} parent=1 // pred_fallthru
      _
    // Predicated region
    $region26: #{r_square.1} parent=1 // pred_check
      _
    $region27: #{r_square.1} parent=1 // pred_check_branch
      %94 = sbr.rel (0) target = $region29
    $region28: #{r_square.1} parent=1 // pred_region
      _
    $region29: #{r_square.1} parent=1 // pred_fallthru
      _
    // Predicated region
    $region30: #{r_square.1} parent=1 // pred_check
      _
    $region31: #{r_square.1} parent=1 // pred_check_branch
      %96 = sbr.rel (0) target = $region33
    $region32: #{r_square.1} parent=1 // pred_region
      _
    $region33: #{r_square.1} parent=1 // pred_fallthru
      _
    %97 = vsyncpa [#allocation6], 1
    %98 = vsyncpa [#allocation8], 1

</llo_original>
